<compile_context>
chip_gen: v6e
topology: v6e:2x2x1
jax: 0.10.0
libtpu: 0.0.40
codegen_flags: <defaults>
</compile_context>

<pallas_src>
import jax
import jax.numpy as jnp
from jax.experimental import pallas as pl
from jax.experimental.pallas import tpu as pltpu


# ----------------------------------------------------------------------------
# Kernel: one grid step handles a (TB, seq, hidden) batch tile.
# ----------------------------------------------------------------------------
def _attn_pool_kernel(x_ref, w_ref, out_ref):
    x = x_ref[...]                                   # (TB, seq, hidden)
    w = w_ref[...].astype(jnp.float32)               # (1, hidden) -> f32 accumulation

    # Linear(hidden, 1) without bias (softmax over seq is shift-invariant):
    # score[b, s] = <x[b, s, :], w>.  Elementwise mul (VPU) + lane reduce (XLU);
    # dense (TB, seq) result, no lane-sparse (TB, seq, 1) intermediates.
    scores = jnp.sum(x * w, axis=-1)                 # (TB, seq), f32

    # Numerically-stable softmax over the sequence axis, per sample.
    m = jnp.max(scores, axis=-1, keepdims=True)      # (TB, 1)
    e = jnp.exp(scores - m)                          # (TB, seq)
    denom = jnp.sum(e, axis=-1, keepdims=True)       # (TB, 1)
    attn = e * pl.reciprocal(denom, approx=True)     # (TB, seq), f32

    # Weighted sum over the sequence axis (f32 accumulation via promotion).
    # NOTE: an MXU einsum 'bs,bsd->bd' is a possible v7x refinement; the VPU
    # path has ample slack here and the kernel stays HBM-bound.
    out = jnp.sum(attn[:, :, None] * x, axis=1)      # (TB, hidden)
    out_ref[...] = out.astype(out_ref.dtype)


# ----------------------------------------------------------------------------
# Wrapper
# ----------------------------------------------------------------------------
def _default_block_batch(b, seq, hidden, itemsize, target_bytes=4 * 1024 * 1024):
    """Batch tile: multiple of 8 sublanes, ~target_bytes per x buffer."""
    per_row = max(seq * hidden * itemsize, 1)
    tb = max(8, (target_bytes // per_row) // 8 * 8)
    return min(tb, b) if b >= 8 else b


def attention_pooling(x, attn_w, attn_b=None, *, block_batch=None):
    """x: (b, seq, hidden); attn_w: (1, hidden) [= nn.Linear(hidden, 1).weight];
    attn_b: (1, 1) bias, accepted for interface parity but mathematically a
    no-op (softmax over the sequence axis cancels a constant shift).
    Returns (b, hidden)."""
    del attn_b  # shift-invariance of softmax: bias has zero effect on output
    b, seq, hidden = x.shape
    itemsize = jnp.dtype(x.dtype).itemsize

    if block_batch is None:
        block_batch = _default_block_batch(b, seq, hidden, itemsize)
    block_batch = min(block_batch, b)

    # VMEM budget: double-buffered x tiles + elementwise temps + output, with
    # headroom.  Capped at 48 MiB so it stays safe on v7x's 64 MiB per-TC VMEM.
    x_tile_bytes = block_batch * seq * hidden * itemsize
    vmem_limit = int(min(48 * 1024 * 1024,
                         max(16 * 1024 * 1024, 6 * x_tile_bytes + (2 << 20))))

    grid = (pl.cdiv(b, block_batch),)
    return pl.pallas_call(
        _attn_pool_kernel,
        out_shape=jax.ShapeDtypeStruct((b, hidden), x.dtype),
        grid=grid,
        in_specs=[
            pl.BlockSpec((block_batch, seq, hidden), lambda i: (i, 0, 0)),  # x
            pl.BlockSpec((1, hidden), lambda i: (0, 0)),                    # attn_w
        ],
        out_specs=pl.BlockSpec((block_batch, hidden), lambda i: (i, 0)),
        compiler_params=pltpu.CompilerParams(
            dimension_semantics=("parallel",),   # shards batch tiles across v7x's 2 TCs
            vmem_limit_bytes=vmem_limit,
        ),
    )(x, attn_w)


# ----------------------------------------------------------------------------
# Demo / correctness check
# ----------------------------------------------------------------------------
if __name__ == "__main__":
    # Small shapes consistent with the module.  hidden = 128 keeps the feature
    # axis lane-dense (unmasked 128-lane stores); batch = 16 with block_batch=8
    # exercises a 2-step grid (double-buffered pipeline + parallel axis).
    b, seq, hidden = 16, 16, 128

    key = jax.random.PRNGKey(0)
    k_x, k_w, k_b = jax.random.split(key, 3)

    x = jax.random.normal(k_x, (b, seq, hidden), dtype=jnp.float32)
    # nn.Linear(hidden, 1): weight (1, hidden), bias (1,) stored as (1, 1).
    attn_w = jax.random.normal(k_w, (1, hidden), jnp.float32) * (1.0 / jnp.sqrt(hidden))
    attn_b = jax.random.normal(k_b, (1, 1), jnp.float32) * 0.02

    out = attention_pooling(x, attn_w, attn_b, block_batch=8)
    out = jax.block_until_ready(out)

    # Pure-JAX reference with PyTorch semantics (bias included -> demonstrates
    # the shift-invariance the kernel relies on).
    ref_scores = jnp.einsum("bsd,d->bs", x, attn_w[0]) + attn_b[0, 0]   # (b, seq)
    ref_attn = jax.nn.softmax(ref_scores, axis=1)                       # (b, seq)
    ref = jnp.einsum("bs,bsd->bd", ref_attn, x)                         # (b, hidden)

    assert out.shape == (b, hidden), out.shape
    assert bool(jnp.all(jnp.isfinite(out)))
    assert jnp.allclose(out, ref, rtol=5e-3, atol=5e-3), float(
        jnp.max(jnp.abs(out - ref)))
    print("KERNEL_OK")
</pallas_src>

<mosaic_0001>
module attributes {stable_mosaic.version = 11 : i64} {
  func.func @_attn_pool_kernel(%arg0: i32, %arg1: memref<8x16x128xf32, #tpu.memory_space<vmem>>, %arg2: memref<1x128xf32, #tpu.memory_space<vmem>>, %arg3: memref<8x128xf32, #tpu.memory_space<vmem>>) attributes {dimension_semantics = [#tpu.dimension_semantics<parallel>], iteration_bounds = array<i64: 2>, scalar_prefetch = 0 : i64, scratch_operands = 0 : i64, tpu.core_type = #tpu.core_type<tc>, window_params = [{transform_indices = @transform_0, window_bounds = array<i64: 8, 16, 128>}, {pipeline_mode = #tpu.pipeline_mode<synchronous>, transform_indices = @transform_1, window_bounds = array<i64: 1, 128>}, {transform_indices = @transform_2, window_bounds = array<i64: 8, 128>}]} {
    %c0 = arith.constant 0 : index
    %c0_0 = arith.constant 0 : index
    %c0_1 = arith.constant 0 : index
    %0 = vector.load %arg1[%c0, %c0_0, %c0_1] : memref<8x16x128xf32, #tpu.memory_space<vmem>>, vector<8x16x128xf32>
    %c0_2 = arith.constant 0 : index
    %c0_3 = arith.constant 0 : index
    %1 = vector.load %arg2[%c0_2, %c0_3] : memref<1x128xf32, #tpu.memory_space<vmem>>, vector<1x128xf32>
    %2 = vector.shape_cast %1 : vector<1x128xf32> to vector<1x1x128xf32>
    %3 = vector.broadcast %2 : vector<1x1x128xf32> to vector<8x16x128xf32>
    %4 = arith.mulf %0, %3 : vector<8x16x128xf32>
    %cst = arith.constant dense<0.000000e+00> : vector<8x16xf32>
    %5 = vector.multi_reduction <add>, %4, %cst [2] : vector<8x16x128xf32> to vector<8x16xf32>
    %cst_4 = arith.constant dense<0xFF800000> : vector<8xf32>
    %6 = vector.multi_reduction <maximumf>, %5, %cst_4 [1] : vector<8x16xf32> to vector<8xf32>
    %7 = vector.shape_cast %6 : vector<8xf32> to vector<8x1xf32>
    %8 = vector.broadcast %7 : vector<8x1xf32> to vector<8x16xf32>
    %9 = arith.subf %5, %8 : vector<8x16xf32>
    %10 = math.exp %9 : vector<8x16xf32>
    %cst_5 = arith.constant dense<0.000000e+00> : vector<8xf32>
    %11 = vector.multi_reduction <add>, %10, %cst_5 [1] : vector<8x16xf32> to vector<8xf32>
    %12 = vector.shape_cast %11 : vector<8xf32> to vector<8x1xf32>
    %13 = tpu.reciprocal %12 {approx = true} : vector<8x1xf32> -> vector<8x1xf32>
    %14 = vector.broadcast %13 : vector<8x1xf32> to vector<8x16xf32>
    %15 = arith.mulf %10, %14 : vector<8x16xf32>
    %16 = vector.shape_cast %15 : vector<8x16xf32> to vector<8x16x1xf32>
    %17 = vector.broadcast %16 : vector<8x16x1xf32> to vector<8x16x128xf32>
    %18 = arith.mulf %17, %0 : vector<8x16x128xf32>
    %cst_6 = arith.constant dense<0.000000e+00> : vector<8x128xf32>
    %19 = vector.multi_reduction <add>, %18, %cst_6 [1] : vector<8x16x128xf32> to vector<8x128xf32>
    %c0_7 = arith.constant 0 : index
    %c0_8 = arith.constant 0 : index
    %20 = vector.load %arg3[%c0_7, %c0_8] : memref<8x128xf32, #tpu.memory_space<vmem>>, vector<8x128xf32>
    tpu.vector_store %arg3[%c0_7, %c0_8], %19 {strides = array<i32>} : memref<8x128xf32, #tpu.memory_space<vmem>>, vector<8x128xf32>,
    return
  }
  func.func @transform_0(%arg0: i32) -> (i32, i32, i32) {
    %c0_i32 = arith.constant 0 : i32
    %c0_i32_0 = arith.constant 0 : i32
    %c0_i32_1 = arith.constant 0 : i32
    return %arg0, %c0_i32, %c0_i32_0 : i32, i32, i32
  }
  func.func @transform_1(%arg0: i32) -> (i32, i32) {
    %c0_i32 = arith.constant 0 : i32
    %c0_i32_0 = arith.constant 0 : i32
    %c0_i32_1 = arith.constant 0 : i32
    return %c0_i32, %c0_i32_0 : i32, i32
  }
  func.func @transform_2(%arg0: i32) -> (i32, i32) {
    %c0_i32 = arith.constant 0 : i32
    %c0_i32_0 = arith.constant 0 : i32
    return %arg0, %c0_i32 : i32, i32
  }
}

</mosaic_0001>

<llo_original>
// kernel: tpu_custom_call.1
$region0: #{tpu_custom_call.1}
  #allocation0 [shape = 'u32[]', space=smem, size = 0x4, offset = 0x4, fixed_abs, tag = 'smem constant byte address 0x4 - core index']
  #allocation1 [shape = 'u32[144,128]{1,0:T(1,128)}', space=vmem, size = 0x12000, scoped, tag = 'internal scratch']
  %s0 = inlined_call_operand.hbm [shape: f32[16,16,128], index: 0, kind: input, shape index: {}]
  %s1 = inlined_call_operand.vmem [shape: f32[1,128], index: 1, kind: input, shape index: {}]
  %s2 = inlined_call_operand.hbm [shape: f32[16,128], index: 2, kind: output, shape index: {}]
  %s3 = sld [smem:[#allocation0]]
  $region45: #{tpu_custom_call.1} parent=0
    _
  %s5 = ssub.s32 1, %s3
  %s6 = scalar_select 0, %s5, %s3
  $region1: #{tpu_custom_call.1} parent=0
    #allocation2 [shape = 'u8[131072]{0}', space=vmem, size = 0x20000, scoped, tag = 'input window, operand 0']
    #allocation3 [shape = 's32[2]{0}', space=sflag, size = 0x8, scoped, tag = 'scoped memory for tpu_custom_call.1']
    #allocation4 [shape = 's32[2]{0}', space=sflag, size = 0x8, scoped, tag = 'scoped memory for tpu_custom_call.1']
    #allocation5 [shape = 'u8[8192]{0}', space=vmem, size = 0x2000, scoped, tag = 'output window, operand 0']
    %7 = vsyncpa [#allocation3], 0
    %s8 = scalar_lea.sflag [#allocation3], 1
    %9 = vsyncpa %s8, 0
    %10 = vsyncpa [#allocation4], 0
    %s11 = scalar_lea.sflag [#allocation4], 1
    %12 = vsyncpa %s11, 0
    loop: start=0, step=1, limit=4
    $region2: #{tpu_custom_call.1} parent=1 // loop_pre_header
      _
    $region3: #{tpu_custom_call.1} parent=1 // loop_header
      %s14 = sphi 0, %s18
      %p15 = scmp.ge.s32.totalorder %s14, 4
      %s24 = sphi 0, %s26
      %s27 = sphi 0, %s24
      %s28 = sphi 0, %s27
      %s44 = sphi 0, %s28
      %s48 = sphi 0, %s48
      %s50 = sphi 0, %s48
      %s51 = sphi 0, %s50
      %s65 = sphi 0, %s51
      %s71 = sphi 0, %s73
      %s74 = sphi 0, %s71
      %s75 = sphi 0, %s74
      %s91 = sphi 0, %s75
    $region4: #{tpu_custom_call.1} parent=1 // loop_header_branch
      %17 = sbr.rel (%p15) target = $region8
    $region5: #{tpu_custom_call.1} parent=1 // loop_body
      %s19 = ssub.s32 %s14, 1
      %s20 = ssub.s32 %s14, 2
      %s21 = sadd.s32 %s14, 1
      %s22 = ssub.s32 %s14, %s21
      %p23 = scmp.eq.s32.totalorder %s22, 0
      %s25 = sadd.s32 %s24, 1
      %s26 = scalar_select %p23, %s24, %s25
      %p29 = pneg %p23
      %p30 = scmp.eq.s32.totalorder %s14, 1
      %p31 = por %p29, %p30
      %p32 = scmp.ne.s32.totalorder %s24, %s27
      %p33 = scmp.eq.s32.totalorder %s14, 0
      %p34 = por %p32, %p33
      %p35 = scmp.ne.s32.totalorder %s24, %s27
      %p36 = scmp.eq.s32.totalorder %s19, 1
      %p37 = por %p35, %p36
      %p38 = scmp.ne.s32.totalorder %s27, %s28
      %p39 = scmp.eq.s32.totalorder %s19, 0
      %p40 = por %p38, %p39
      %p41 = scmp.ne.s32.totalorder %s27, %s28
      %p42 = scmp.eq.s32.totalorder %s20, 1
      %p43 = por %p41, %p42
      %p45 = scmp.ne.s32.totalorder %s28, %s44
      %p46 = scmp.eq.s32.totalorder %s20, 0
      %p47 = por %p45, %p46
      %s49 = sadd.s32 %s48, 1
      %p52 = scmp.eq.s32.totalorder %s14, 1
      %p53 = scmp.ne.s32.totalorder %s48, %s50
      %p54 = scmp.eq.s32.totalorder %s14, 0
      %p55 = por %p53, %p54
      %p56 = scmp.ne.s32.totalorder %s48, %s50
      %p57 = scmp.eq.s32.totalorder %s19, 1
      %p58 = por %p56, %p57
      %p59 = scmp.ne.s32.totalorder %s50, %s51
      %p60 = scmp.eq.s32.totalorder %s19, 0
      %p61 = por %p59, %p60
      %p62 = scmp.ne.s32.totalorder %s50, %s51
      %p63 = scmp.eq.s32.totalorder %s20, 1
      %p64 = por %p62, %p63
      %p66 = scmp.ne.s32.totalorder %s51, %s65
      %p67 = scmp.eq.s32.totalorder %s20, 0
      %p68 = por %p66, %p67
      %s69 = ssub.s32 %s14, %s21
      %p70 = scmp.eq.s32.totalorder %s69, 0
      %s72 = sadd.s32 %s71, 1
      %s73 = scalar_select %p70, %s71, %s72
      %p76 = pneg %p70
      %p77 = scmp.eq.s32.totalorder %s14, 1
      %p78 = por %p76, %p77
      %p79 = scmp.ne.s32.totalorder %s71, %s74
      %p80 = scmp.eq.s32.totalorder %s14, 0
      %p81 = por %p79, %p80
      %p82 = scmp.ne.s32.totalorder %s71, %s74
      %p83 = scmp.eq.s32.totalorder %s19, 1
      %p84 = por %p82, %p83
      %p85 = scmp.ne.s32.totalorder %s74, %s75
      %p86 = scmp.eq.s32.totalorder %s19, 0
      %p87 = por %p85, %p86
      %p88 = scmp.ne.s32.totalorder %s74, %s75
      %p89 = scmp.eq.s32.totalorder %s20, 1
      %p90 = por %p88, %p89
      %p92 = scmp.ne.s32.totalorder %s75, %s91
      %p93 = scmp.eq.s32.totalorder %s20, 0
      %p94 = por %p92, %p93
      %p95 = scmp.le.s32.totalorder 1, %s14
      %p96 = scmp.lt.s32.totalorder %s14, 3
      %p97 = pnand %p95, %p96
      %p98 = pneg %p97
      // Predicated region
      $region9: #{tpu_custom_call.1} parent=5 // pred_check
        _
      $region10: #{tpu_custom_call.1} parent=5 // pred_check_branch
        %100 = sbr.rel (%p97) target = $region12
      $region11: #{tpu_custom_call.1} parent=5 // pred_region
        %s101 = ssub.s32 %s14, 1
        // Predicated region
        $region13: #{tpu_custom_call.1} parent=11 // pred_check
          %p102 = pneg %p61
        $region14: #{tpu_custom_call.1} parent=11 // pred_check_branch
          %104 = sbr.rel (%p102) target = $region16
        $region15: #{tpu_custom_call.1} parent=11 // pred_region
          _
        $region16: #{tpu_custom_call.1} parent=11 // pred_fallthru
          _
      $region12: #{tpu_custom_call.1} parent=5 // pred_fallthru
        _
      %p105 = scmp.lt.s32.totalorder %s14, 2
      // Predicated region
      $region17: #{tpu_custom_call.1} parent=5 // pred_check
        %p106 = pneg %p105
      $region18: #{tpu_custom_call.1} parent=5 // pred_check_branch
        %108 = sbr.rel (%p106) target = $region20
      $region19: #{tpu_custom_call.1} parent=5 // pred_region
        // Predicated region
        $region21: #{tpu_custom_call.1} parent=19 // pred_check
          %p109 = pneg %p34
        $region22: #{tpu_custom_call.1} parent=19 // pred_check_branch
          %111 = sbr.rel (%p109) target = $region24
        $region23: #{tpu_custom_call.1} parent=19 // pred_region
          %s112 = sand.u32 %s24, 1
          %s113 = scalar_lea.sflag [#allocation3], %s112
          %s114 = sand.u32 %s24, 1
          %s115 = smul.addr %s114, 128
          %s116 = scalar_lea.vmem [#allocation2], %s115
          %s117 = smul.u32 8, %s14
          %s119 = ssub.s32 2048, 2048
          %120 = vsyncadd %s113, %s119
          %s121 = smul.addr %s117, 2
          %s122 = smul.addr %s121, 128
          %s123 = scalar_lea.hbm %s0, %s122
          %s124 = sshll.u32 %s116, 4
          %s125 = int_to_ptr.vmem [resolvable:$true] %s124
          %130 = dma.hbm_to_vmem [thread:$0]  %s123, 2048, %s125, %s113, 128, 128, 8
        $region24: #{tpu_custom_call.1} parent=19 // pred_fallthru
          _
      $region20: #{tpu_custom_call.1} parent=5 // pred_fallthru
        _
      %p131 = scmp.le.s32.totalorder 1, %s14
      %p132 = scmp.lt.s32.totalorder %s14, 3
      %p133 = pnand %p131, %p132
      %p134 = pneg %p133
      // Predicated region
      $region25: #{tpu_custom_call.1} parent=5 // pred_check
        _
      $region26: #{tpu_custom_call.1} parent=5 // pred_check_branch
        %136 = sbr.rel (%p133) target = $region28
      $region27: #{tpu_custom_call.1} parent=5 // pred_region
        %s137 = ssub.s32 %s14, 1
        %s138 = sand.u32 %s27, 1
        %s139 = scalar_lea.sflag [#allocation3], %s138
        %s140 = sand.u32 %s27, 1
        %s141 = smul.addr %s140, 128
        %s142 = scalar_lea.vmem [#allocation2], %s141
        // Predicated region
        $region29: #{tpu_custom_call.1} parent=27 // pred_check
          %p143 = pneg %p40
        $region30: #{tpu_custom_call.1} parent=27 // pred_check_branch
          %145 = sbr.rel (%p143) target = $region32
        $region31: #{tpu_custom_call.1} parent=27 // pred_region
          %146 = dma.done %s139, 2048
        $region32: #{tpu_custom_call.1} parent=27 // pred_fallthru
          _
        %s147 = sand.u32 %s27, 1
        %s148 = scalar_lea.sflag [#allocation3], %s147
        %s149 = sand.u32 %s27, 1
        %s150 = smul.addr %s149, 128
        %s151 = scalar_lea.vmem [#allocation2], %s150
        %p152 = pneg %p40
        %p153 = pneg %p37
        %p154 = pneg %p61
        %p155 = pneg %p58
        %p156 = pneg %p87
        %p157 = pneg %p84
        %s158 = sand.u32 %s74, 1
        %s159 = scalar_lea.sflag [#allocation4], %s158
        %s160 = sand.u32 %s74, 1
        %s161 = smul.addr %s160, 8
        %s162 = scalar_lea.vmem [#allocation5], %s161
        %s163 = smul.u32 8, %s19
        %v164 = vld [vmem:[%s142] sm:$0xff]
        %v165 = vld [vmem:[%s142 + $0x8] sm:$0xff]
        %v166 = vld [vmem:[%s142 + $0x10] sm:$0xff]
        %v167 = vld [vmem:[%s142 + $0x18] sm:$0xff]
        %v168 = vld [vmem:[%s142 + $0x20] sm:$0xff]
        %v169 = vld [vmem:[%s142 + $0x28] sm:$0xff]
        %v170 = vld [vmem:[%s142 + $0x30] sm:$0xff]
        %v171 = vld [vmem:[%s142 + $0x38] sm:$0xff]
        %v172 = vld [vmem:[%s142 + $0x40] sm:$0xff]
        %v173 = vld [vmem:[%s142 + $0x48] sm:$0xff]
        %v174 = vld [vmem:[%s142 + $0x50] sm:$0xff]
        %v175 = vld [vmem:[%s142 + $0x58] sm:$0xff]
        %v176 = vld [vmem:[%s142 + $0x60] sm:$0xff]
        %v177 = vld [vmem:[%s142 + $0x68] sm:$0xff]
        %v178 = vld [vmem:[%s142 + $0x70] sm:$0xff]
        %v179 = vld [vmem:[%s142 + $0x78] sm:$0xff]
        %v180 = vld [vmem:[%s1] sm:$0x1]
        %v182 = vlaneseq
        %v183 = vshrl.u32 %v182, 7
        %v184 = vsub.s32 0, %v183
        %v185 = vrot.slane %v180, %v184
        %v187 = vmul.f32 %v164, %v185
        %v188 = vmul.f32 %v165, %v185
        %v189 = vmul.f32 %v166, %v185
        %v190 = vmul.f32 %v167, %v185
        %v191 = vmul.f32 %v168, %v185
        %v192 = vmul.f32 %v169, %v185
        %v193 = vmul.f32 %v170, %v185
        %v194 = vmul.f32 %v171, %v185
        %v195 = vmul.f32 %v172, %v185
        %v196 = vmul.f32 %v173, %v185
        %v197 = vmul.f32 %v174, %v185
        %v198 = vmul.f32 %v175, %v185
        %v199 = vmul.f32 %v176, %v185
        %v200 = vmul.f32 %v177, %v185
        %v201 = vmul.f32 %v178, %v185
        %v202 = vmul.f32 %v179, %v185
        %203 = vadd.xlane.f32.xlu0 %v187
        %v204 = vpop.xlane.xlu0 %203
        %205 = vadd.xlane.f32.xlu0 %v188
        %v206 = vpop.xlane.xlu0 %205
        %207 = vadd.xlane.f32.xlu0 %v189
        %v208 = vpop.xlane.xlu0 %207
        %209 = vadd.xlane.f32.xlu0 %v190
        %v210 = vpop.xlane.xlu0 %209
        %211 = vadd.xlane.f32.xlu0 %v191
        %v212 = vpop.xlane.xlu0 %211
        %213 = vadd.xlane.f32.xlu0 %v192
        %v214 = vpop.xlane.xlu0 %213
        %215 = vadd.xlane.f32.xlu0 %v193
        %v216 = vpop.xlane.xlu0 %215
        %217 = vadd.xlane.f32.xlu0 %v194
        %v218 = vpop.xlane.xlu0 %217
        %219 = vadd.xlane.f32.xlu0 %v195
        %v220 = vpop.xlane.xlu0 %219
        %221 = vadd.xlane.f32.xlu0 %v196
        %v222 = vpop.xlane.xlu0 %221
        %223 = vadd.xlane.f32.xlu0 %v197
        %v224 = vpop.xlane.xlu0 %223
        %225 = vadd.xlane.f32.xlu0 %v198
        %v226 = vpop.xlane.xlu0 %225
        %227 = vadd.xlane.f32.xlu0 %v199
        %v228 = vpop.xlane.xlu0 %227
        %229 = vadd.xlane.f32.xlu0 %v200
        %v230 = vpop.xlane.xlu0 %229
        %231 = vadd.xlane.f32.xlu0 %v201
        %v232 = vpop.xlane.xlu0 %231
        %233 = vadd.xlane.f32.xlu0 %v202
        %v234 = vpop.xlane.xlu0 %233
        %v251 = vlaneseq
        %v252 = vand.u32 %v251, 127
        %v253 = vlaneseq
        %v254 = vshrl.u32 %v253, 7
        %v255 = vsub.s32 %v252, %v254
        %v256 = vrot.slane %v204, %v255
        %v257 = vadd.s32 %v252, 4294967288
        %v258 = vlaneseq
        %v259 = vshrl.u32 %v258, 7
        %v260 = vsub.s32 %v257, %v259
        %v261 = vrot.slane %v206, %v260
        %vm262 = vcmask 130112
        %v263 = vsel %vm262, %v261, %v256
        %v264 = vlaneseq
        %v265 = vshrl.u32 %v264, 7
        %v266 = vsub.s32 %v252, %v265
        %v267 = vrot.slane %v208, %v266
        %v268 = vlaneseq
        %v269 = vshrl.u32 %v268, 7
        %v270 = vsub.s32 %v257, %v269
        %v271 = vrot.slane %v210, %v270
        %v272 = vsel %vm262, %v271, %v267
        %v273 = vlaneseq
        %v274 = vshrl.u32 %v273, 7
        %v275 = vsub.s32 %v252, %v274
        %v276 = vrot.slane %v212, %v275
        %v277 = vlaneseq
        %v278 = vshrl.u32 %v277, 7
        %v279 = vsub.s32 %v257, %v278
        %v280 = vrot.slane %v214, %v279
        %v281 = vsel %vm262, %v280, %v276
        %v282 = vlaneseq
        %v283 = vshrl.u32 %v282, 7
        %v284 = vsub.s32 %v252, %v283
        %v285 = vrot.slane %v216, %v284
        %v286 = vlaneseq
        %v287 = vshrl.u32 %v286, 7
        %v288 = vsub.s32 %v257, %v287
        %v289 = vrot.slane %v218, %v288
        %v290 = vsel %vm262, %v289, %v285
        %v291 = vlaneseq
        %v292 = vshrl.u32 %v291, 7
        %v293 = vsub.s32 %v252, %v292
        %v294 = vrot.slane %v220, %v293
        %v295 = vlaneseq
        %v296 = vshrl.u32 %v295, 7
        %v297 = vsub.s32 %v257, %v296
        %v298 = vrot.slane %v222, %v297
        %v299 = vsel %vm262, %v298, %v294
        %v300 = vlaneseq
        %v301 = vshrl.u32 %v300, 7
        %v302 = vsub.s32 %v252, %v301
        %v303 = vrot.slane %v224, %v302
        %v304 = vlaneseq
        %v305 = vshrl.u32 %v304, 7
        %v306 = vsub.s32 %v257, %v305
        %v307 = vrot.slane %v226, %v306
        %v308 = vsel %vm262, %v307, %v303
        %v309 = vlaneseq
        %v310 = vshrl.u32 %v309, 7
        %v311 = vsub.s32 %v252, %v310
        %v312 = vrot.slane %v228, %v311
        %v313 = vlaneseq
        %v314 = vshrl.u32 %v313, 7
        %v315 = vsub.s32 %v257, %v314
        %v316 = vrot.slane %v230, %v315
        %v317 = vsel %vm262, %v316, %v312
        %v318 = vlaneseq
        %v319 = vshrl.u32 %v318, 7
        %v320 = vsub.s32 %v252, %v319
        %v321 = vrot.slane %v232, %v320
        %v322 = vlaneseq
        %v323 = vshrl.u32 %v322, 7
        %v324 = vsub.s32 %v257, %v323
        %v325 = vrot.slane %v234, %v324
        %v326 = vsel %vm262, %v325, %v321
        %vm327 = vcmask 1041409
        %v328 = vsel %vm327, %v272, %v263
        %vm329 = vcmask 1042434
        %v330 = vsel %vm329, %v281, %v328
        %vm331 = vcmask 1043459
        %v332 = vsel %vm331, %v290, %v330
        %vm333 = vcmask 1044484
        %v334 = vsel %vm333, %v299, %v332
        %vm335 = vcmask 1045509
        %v336 = vsel %vm335, %v308, %v334
        %vm337 = vcmask 1046534
        %v338 = vsel %vm337, %v317, %v336
        %vm339 = vcmask 1047559
        %v340 = vsel %vm339, %v326, %v338
        %vm342 = vcmask 130048
        %v343 = vsel %vm342, %v340, -inf
        %344 = vmax.xlane.f32.xlu0 %v343
        %v345 = vpop.xlane.xlu0 %344
        %v347 = vlaneseq
        %v348 = vshrl.u32 %v347, 7
        %v349 = vsub.s32 0, %v348
        %v350 = vrot.slane %v345, %v349
        %v351 = vlaneseq
        %v352 = vshrl.u32 %v351, 7
        %v353 = vsub.s32 1, %v352
        %v354 = vrot.slane %v345, %v353
        %v355 = vlaneseq
        %v356 = vshrl.u32 %v355, 7
        %v357 = vsub.s32 2, %v356
        %v358 = vrot.slane %v345, %v357
        %v359 = vlaneseq
        %v360 = vshrl.u32 %v359, 7
        %v361 = vsub.s32 3, %v360
        %v362 = vrot.slane %v345, %v361
        %v363 = vlaneseq
        %v364 = vshrl.u32 %v363, 7
        %v365 = vsub.s32 4, %v364
        %v366 = vrot.slane %v345, %v365
        %v367 = vlaneseq
        %v368 = vshrl.u32 %v367, 7
        %v369 = vsub.s32 5, %v368
        %v370 = vrot.slane %v345, %v369
        %v371 = vlaneseq
        %v372 = vshrl.u32 %v371, 7
        %v373 = vsub.s32 6, %v372
        %v374 = vrot.slane %v345, %v373
        %v375 = vlaneseq
        %v376 = vshrl.u32 %v375, 7
        %v377 = vsub.s32 7, %v376
        %v378 = vrot.slane %v345, %v377
        %v387 = vsub.f32 %v204, %v350
        %v388 = vsub.f32 %v206, %v350
        %v389 = vsub.f32 %v208, %v354
        %v390 = vsub.f32 %v210, %v354
        %v391 = vsub.f32 %v212, %v358
        %v392 = vsub.f32 %v214, %v358
        %v393 = vsub.f32 %v216, %v362
        %v394 = vsub.f32 %v218, %v362
        %v395 = vsub.f32 %v220, %v366
        %v396 = vsub.f32 %v222, %v366
        %v397 = vsub.f32 %v224, %v370
        %v398 = vsub.f32 %v226, %v370
        %v399 = vsub.f32 %v228, %v374
        %v400 = vsub.f32 %v230, %v374
        %v401 = vsub.f32 %v232, %v378
        %v402 = vsub.f32 %v234, %v378
        %v403 = vmul.f32 %v387, 1.442695
        %v404 = vpow.pop %v403
        %v405 = vmul.f32 %v388, 1.442695
        %v406 = vpow.pop %v405
        %v407 = vmul.f32 %v389, 1.442695
        %v408 = vpow.pop %v407
        %v409 = vmul.f32 %v390, 1.442695
        %v410 = vpow.pop %v409
        %v411 = vmul.f32 %v391, 1.442695
        %v412 = vpow.pop %v411
        %v413 = vmul.f32 %v392, 1.442695
        %v414 = vpow.pop %v413
        %v415 = vmul.f32 %v393, 1.442695
        %v416 = vpow.pop %v415
        %v417 = vmul.f32 %v394, 1.442695
        %v418 = vpow.pop %v417
        %v419 = vmul.f32 %v395, 1.442695
        %v420 = vpow.pop %v419
        %v421 = vmul.f32 %v396, 1.442695
        %v422 = vpow.pop %v421
        %v423 = vmul.f32 %v397, 1.442695
        %v424 = vpow.pop %v423
        %v425 = vmul.f32 %v398, 1.442695
        %v426 = vpow.pop %v425
        %v427 = vmul.f32 %v399, 1.442695
        %v428 = vpow.pop %v427
        %v429 = vmul.f32 %v400, 1.442695
        %v430 = vpow.pop %v429
        %v431 = vmul.f32 %v401, 1.442695
        %v432 = vpow.pop %v431
        %v433 = vmul.f32 %v402, 1.442695
        %v434 = vpow.pop %v433
        %451 = vset.pattern.permute.xlu0 0
        %452 = vperm.xlu0 %451, %v404
        %v453 = vpop.permute.xlu0 %452
        %454 = vset.pattern.permute.xlu0 0
        %455 = vperm.xlu0 %454, %v406
        %v456 = vpop.permute.xlu0 %455
        %457 = vset.pattern.permute.xlu0 0
        %458 = vperm.xlu0 %457, %v408
        %v459 = vpop.permute.xlu0 %458
        %460 = vset.pattern.permute.xlu0 0
        %461 = vperm.xlu0 %460, %v410
        %v462 = vpop.permute.xlu0 %461
        %463 = vset.pattern.permute.xlu0 0
        %464 = vperm.xlu0 %463, %v412
        %v465 = vpop.permute.xlu0 %464
        %466 = vset.pattern.permute.xlu0 0
        %467 = vperm.xlu0 %466, %v414
        %v468 = vpop.permute.xlu0 %467
        %469 = vset.pattern.permute.xlu0 0
        %470 = vperm.xlu0 %469, %v416
        %v471 = vpop.permute.xlu0 %470
        %472 = vset.pattern.permute.xlu0 0
        %473 = vperm.xlu0 %472, %v418
        %v474 = vpop.permute.xlu0 %473
        %475 = vset.pattern.permute.xlu0 0
        %476 = vperm.xlu0 %475, %v420
        %v477 = vpop.permute.xlu0 %476
        %478 = vset.pattern.permute.xlu0 0
        %479 = vperm.xlu0 %478, %v422
        %v480 = vpop.permute.xlu0 %479
        %481 = vset.pattern.permute.xlu0 0
        %482 = vperm.xlu0 %481, %v424
        %v483 = vpop.permute.xlu0 %482
        %484 = vset.pattern.permute.xlu0 0
        %485 = vperm.xlu0 %484, %v426
        %v486 = vpop.permute.xlu0 %485
        %487 = vset.pattern.permute.xlu0 0
        %488 = vperm.xlu0 %487, %v428
        %v489 = vpop.permute.xlu0 %488
        %490 = vset.pattern.permute.xlu0 0
        %491 = vperm.xlu0 %490, %v430
        %v492 = vpop.permute.xlu0 %491
        %493 = vset.pattern.permute.xlu0 0
        %494 = vperm.xlu0 %493, %v432
        %v495 = vpop.permute.xlu0 %494
        %496 = vset.pattern.permute.xlu0 0
        %497 = vperm.xlu0 %496, %v434
        %v498 = vpop.permute.xlu0 %497
        %v499 = vlaneseq
        %v500 = vshrl.u32 %v499, 7
        %v501 = vsub.s32 %v252, %v500
        %v502 = vrot.slane %v453, %v501
        %v503 = vlaneseq
        %v504 = vshrl.u32 %v503, 7
        %v505 = vsub.s32 %v257, %v504
        %v506 = vrot.slane %v456, %v505
        %v507 = vsel %vm262, %v506, %v502
        %v508 = vlaneseq
        %v509 = vshrl.u32 %v508, 7
        %v510 = vsub.s32 %v252, %v509
        %v511 = vrot.slane %v459, %v510
        %v512 = vlaneseq
        %v513 = vshrl.u32 %v512, 7
        %v514 = vsub.s32 %v257, %v513
        %v515 = vrot.slane %v462, %v514
        %v516 = vsel %vm262, %v515, %v511
        %v517 = vlaneseq
        %v518 = vshrl.u32 %v517, 7
        %v519 = vsub.s32 %v252, %v518
        %v520 = vrot.slane %v465, %v519
        %v521 = vlaneseq
        %v522 = vshrl.u32 %v521, 7
        %v523 = vsub.s32 %v257, %v522
        %v524 = vrot.slane %v468, %v523
        %v525 = vsel %vm262, %v524, %v520
        %v526 = vlaneseq
        %v527 = vshrl.u32 %v526, 7
        %v528 = vsub.s32 %v252, %v527
        %v529 = vrot.slane %v471, %v528
        %v530 = vlaneseq
        %v531 = vshrl.u32 %v530, 7
        %v532 = vsub.s32 %v257, %v531
        %v533 = vrot.slane %v474, %v532
        %v534 = vsel %vm262, %v533, %v529
        %v535 = vlaneseq
        %v536 = vshrl.u32 %v535, 7
        %v537 = vsub.s32 %v252, %v536
        %v538 = vrot.slane %v477, %v537
        %v539 = vlaneseq
        %v540 = vshrl.u32 %v539, 7
        %v541 = vsub.s32 %v257, %v540
        %v542 = vrot.slane %v480, %v541
        %v543 = vsel %vm262, %v542, %v538
        %v544 = vlaneseq
        %v545 = vshrl.u32 %v544, 7
        %v546 = vsub.s32 %v252, %v545
        %v547 = vrot.slane %v483, %v546
        %v548 = vlaneseq
        %v549 = vshrl.u32 %v548, 7
        %v550 = vsub.s32 %v257, %v549
        %v551 = vrot.slane %v486, %v550
        %v552 = vsel %vm262, %v551, %v547
        %v553 = vlaneseq
        %v554 = vshrl.u32 %v553, 7
        %v555 = vsub.s32 %v252, %v554
        %v556 = vrot.slane %v489, %v555
        %v557 = vlaneseq
        %v558 = vshrl.u32 %v557, 7
        %v559 = vsub.s32 %v257, %v558
        %v560 = vrot.slane %v492, %v559
        %v561 = vsel %vm262, %v560, %v556
        %v562 = vlaneseq
        %v563 = vshrl.u32 %v562, 7
        %v564 = vsub.s32 %v252, %v563
        %v565 = vrot.slane %v495, %v564
        %v566 = vlaneseq
        %v567 = vshrl.u32 %v566, 7
        %v568 = vsub.s32 %v257, %v567
        %v569 = vrot.slane %v498, %v568
        %v570 = vsel %vm262, %v569, %v565
        %v571 = vsel %vm327, %v516, %v507
        %v572 = vsel %vm329, %v525, %v571
        %v573 = vsel %vm331, %v534, %v572
        %v574 = vsel %vm333, %v543, %v573
        %v575 = vsel %vm335, %v552, %v574
        %v576 = vsel %vm337, %v561, %v575
        %v577 = vsel %vm339, %v570, %v576
        %v579 = vsel %vm342, %v577, 0.0
        %580 = vadd.xlane.f32.xlu0 %v579
        %v581 = vpop.xlane.xlu0 %580
        %v582 = vrcp.pop %v581
        %v584 = vlaneseq
        %v585 = vshrl.u32 %v584, 7
        %v586 = vsub.s32 0, %v585
        %v587 = vrot.slane %v582, %v586
        %v588 = vlaneseq
        %v589 = vshrl.u32 %v588, 7
        %v590 = vsub.s32 1, %v589
        %v591 = vrot.slane %v582, %v590
        %v592 = vlaneseq
        %v593 = vshrl.u32 %v592, 7
        %v594 = vsub.s32 2, %v593
        %v595 = vrot.slane %v582, %v594
        %v596 = vlaneseq
        %v597 = vshrl.u32 %v596, 7
        %v598 = vsub.s32 3, %v597
        %v599 = vrot.slane %v582, %v598
        %v600 = vlaneseq
        %v601 = vshrl.u32 %v600, 7
        %v602 = vsub.s32 4, %v601
        %v603 = vrot.slane %v582, %v602
        %v604 = vlaneseq
        %v605 = vshrl.u32 %v604, 7
        %v606 = vsub.s32 5, %v605
        %v607 = vrot.slane %v582, %v606
        %v608 = vlaneseq
        %v609 = vshrl.u32 %v608, 7
        %v610 = vsub.s32 6, %v609
        %v611 = vrot.slane %v582, %v610
        %v612 = vlaneseq
        %v613 = vshrl.u32 %v612, 7
        %v614 = vsub.s32 7, %v613
        %v615 = vrot.slane %v582, %v614
        %v624 = vmul.f32 %v404, %v587
        %v625 = vmul.f32 %v406, %v587
        %v626 = vmul.f32 %v408, %v591
        %v627 = vmul.f32 %v410, %v591
        %v628 = vmul.f32 %v412, %v595
        %v629 = vmul.f32 %v414, %v595
        %v630 = vmul.f32 %v416, %v599
        %v631 = vmul.f32 %v418, %v599
        %v632 = vmul.f32 %v420, %v603
        %v633 = vmul.f32 %v422, %v603
        %v634 = vmul.f32 %v424, %v607
        %v635 = vmul.f32 %v426, %v607
        %v636 = vmul.f32 %v428, %v611
        %v637 = vmul.f32 %v430, %v611
        %v638 = vmul.f32 %v432, %v615
        %v639 = vmul.f32 %v434, %v615
        %641 = vset.pattern.permute.xlu0 0
        %642 = vperm.xlu0 %641, %v624
        %v643 = vpop.permute.xlu0 %642
        %646 = vset.pattern.permute.xlu0 0
        %647 = vperm.xlu0 %646, %v625
        %v648 = vpop.permute.xlu0 %647
        %651 = vset.pattern.permute.xlu0 0
        %652 = vperm.xlu0 %651, %v626
        %v653 = vpop.permute.xlu0 %652
        %656 = vset.pattern.permute.xlu0 0
        %657 = vperm.xlu0 %656, %v627
        %v658 = vpop.permute.xlu0 %657
        %661 = vset.pattern.permute.xlu0 0
        %662 = vperm.xlu0 %661, %v628
        %v663 = vpop.permute.xlu0 %662
        %666 = vset.pattern.permute.xlu0 0
        %667 = vperm.xlu0 %666, %v629
        %v668 = vpop.permute.xlu0 %667
        %671 = vset.pattern.permute.xlu0 0
        %672 = vperm.xlu0 %671, %v630
        %v673 = vpop.permute.xlu0 %672
        %676 = vset.pattern.permute.xlu0 0
        %677 = vperm.xlu0 %676, %v631
        %v678 = vpop.permute.xlu0 %677
        %681 = vset.pattern.permute.xlu0 0
        %682 = vperm.xlu0 %681, %v632
        %v683 = vpop.permute.xlu0 %682
        %686 = vset.pattern.permute.xlu0 0
        %687 = vperm.xlu0 %686, %v633
        %v688 = vpop.permute.xlu0 %687
        %691 = vset.pattern.permute.xlu0 0
        %692 = vperm.xlu0 %691, %v634
        %v693 = vpop.permute.xlu0 %692
        %696 = vset.pattern.permute.xlu0 0
        %697 = vperm.xlu0 %696, %v635
        %v698 = vpop.permute.xlu0 %697
        %701 = vset.pattern.permute.xlu0 0
        %702 = vperm.xlu0 %701, %v636
        %v703 = vpop.permute.xlu0 %702
        %706 = vset.pattern.permute.xlu0 0
        %707 = vperm.xlu0 %706, %v637
        %v708 = vpop.permute.xlu0 %707
        %711 = vset.pattern.permute.xlu0 0
        %712 = vperm.xlu0 %711, %v638
        %v713 = vpop.permute.xlu0 %712
        %716 = vset.pattern.permute.xlu0 0
        %717 = vperm.xlu0 %716, %v639
        %v718 = vpop.permute.xlu0 %717
        %v720 = vmul.f32 %v643, %v164
        %v721 = vmul.f32 %v648, %v165
        %v722 = vmul.f32 %v653, %v166
        %v723 = vmul.f32 %v658, %v167
        %v724 = vmul.f32 %v663, %v168
        %v725 = vmul.f32 %v668, %v169
        %v726 = vmul.f32 %v673, %v170
        %v727 = vmul.f32 %v678, %v171
        %v728 = vmul.f32 %v683, %v172
        %v729 = vmul.f32 %v688, %v173
        %v730 = vmul.f32 %v693, %v174
        %v731 = vmul.f32 %v698, %v175
        %v732 = vmul.f32 %v703, %v176
        %v733 = vmul.f32 %v708, %v177
        %v734 = vmul.f32 %v713, %v178
        %v735 = vmul.f32 %v718, %v179
        %v736 = vadd.f32 %v720, %v721
        %v737 = vrot.slane %v736, 4
        %v738 = vadd.f32 %v736, %v737
        %v739 = vrot.slane %v738, 2
        %v740 = vadd.f32 %v738, %v739
        %v741 = vrot.slane %v740, 1
        %v742 = vadd.f32 %v740, %v741
        %v743 = vadd.f32 %v722, %v723
        %v744 = vrot.slane %v743, 4
        %v745 = vadd.f32 %v743, %v744
        %v746 = vrot.slane %v745, 2
        %v747 = vadd.f32 %v745, %v746
        %v748 = vrot.slane %v747, 1
        %v749 = vadd.f32 %v747, %v748
        %v750 = vadd.f32 %v724, %v725
        %v751 = vrot.slane %v750, 4
        %v752 = vadd.f32 %v750, %v751
        %v753 = vrot.slane %v752, 2
        %v754 = vadd.f32 %v752, %v753
        %v755 = vrot.slane %v754, 1
        %v756 = vadd.f32 %v754, %v755
        %v757 = vadd.f32 %v726, %v727
        %v758 = vrot.slane %v757, 4
        %v759 = vadd.f32 %v757, %v758
        %v760 = vrot.slane %v759, 2
        %v761 = vadd.f32 %v759, %v760
        %v762 = vrot.slane %v761, 1
        %v763 = vadd.f32 %v761, %v762
        %v764 = vadd.f32 %v728, %v729
        %v765 = vrot.slane %v764, 4
        %v766 = vadd.f32 %v764, %v765
        %v767 = vrot.slane %v766, 2
        %v768 = vadd.f32 %v766, %v767
        %v769 = vrot.slane %v768, 1
        %v770 = vadd.f32 %v768, %v769
        %v771 = vadd.f32 %v730, %v731
        %v772 = vrot.slane %v771, 4
        %v773 = vadd.f32 %v771, %v772
        %v774 = vrot.slane %v773, 2
        %v775 = vadd.f32 %v773, %v774
        %v776 = vrot.slane %v775, 1
        %v777 = vadd.f32 %v775, %v776
        %v778 = vadd.f32 %v732, %v733
        %v779 = vrot.slane %v778, 4
        %v780 = vadd.f32 %v778, %v779
        %v781 = vrot.slane %v780, 2
        %v782 = vadd.f32 %v780, %v781
        %v783 = vrot.slane %v782, 1
        %v784 = vadd.f32 %v782, %v783
        %v785 = vadd.f32 %v734, %v735
        %v786 = vrot.slane %v785, 4
        %v787 = vadd.f32 %v785, %v786
        %v788 = vrot.slane %v787, 2
        %v789 = vadd.f32 %v787, %v788
        %v790 = vrot.slane %v789, 1
        %v791 = vadd.f32 %v789, %v790
        %v800 = vsel %vm327, %v749, %v742
        %v801 = vsel %vm329, %v756, %v800
        %v802 = vsel %vm331, %v763, %v801
        %v803 = vsel %vm333, %v770, %v802
        %v804 = vsel %vm335, %v777, %v803
        %v805 = vsel %vm337, %v784, %v804
        %v806 = vsel %vm339, %v791, %v805
        %808 = vst [vmem:[%s162] sm:$0xff] %v806
        %s809 = sand.u32 %s74, 1
        %s810 = scalar_lea.sflag [#allocation4], %s809
        %s811 = sand.u32 %s74, 1
        %s812 = smul.addr %s811, 8
        %s813 = scalar_lea.vmem [#allocation5], %s812
        // Predicated region
        $region33: #{tpu_custom_call.1} parent=27 // pred_check
          %p814 = pneg %p84
        $region34: #{tpu_custom_call.1} parent=27 // pred_check_branch
          %816 = sbr.rel (%p814) target = $region36
        $region35: #{tpu_custom_call.1} parent=27 // pred_region
          %s818 = ssub.s32 128, 128
          %819 = vsyncadd %s810, %s818
          %s820 = smul.addr %s19, 128
          %s821 = scalar_lea.hbm %s2, %s820
          %s823 = sshll.u32 %s813, 4
          %s824 = int_to_ptr.vmem [resolvable:$true] %s823
          %826 = dma.vmem_to_hbm [thread:$0]  %s824, 128, %s821, %s810
        $region36: #{tpu_custom_call.1} parent=27 // pred_fallthru
          _
      $region28: #{tpu_custom_call.1} parent=5 // pred_fallthru
        _
      %p827 = scmp.le.s32.totalorder 2, %s14
      // Predicated region
      $region37: #{tpu_custom_call.1} parent=5 // pred_check
        %p828 = pneg %p827
      $region38: #{tpu_custom_call.1} parent=5 // pred_check_branch
        %830 = sbr.rel (%p828) target = $region40
      $region39: #{tpu_custom_call.1} parent=5 // pred_region
        %s831 = ssub.s32 %s14, 2
        // Predicated region
        $region41: #{tpu_custom_call.1} parent=39 // pred_check
          %p832 = pneg %p90
        $region42: #{tpu_custom_call.1} parent=39 // pred_check_branch
          %834 = sbr.rel (%p832) target = $region44
        $region43: #{tpu_custom_call.1} parent=39 // pred_region
          %s835 = sand.u32 %s75, 1
          %s836 = scalar_lea.sflag [#allocation4], %s835
          %s837 = sand.u32 %s75, 1
          %s838 = smul.addr %s837, 8
          %s839 = scalar_lea.vmem [#allocation5], %s838
          %840 = dma.done %s836, 128
        $region44: #{tpu_custom_call.1} parent=39 // pred_fallthru
          _
      $region40: #{tpu_custom_call.1} parent=5 // pred_fallthru
        _
    $region6: #{tpu_custom_call.1} parent=1 // loop_footer
      %s18 = sadd.s32 1, %s14
    $region7: #{tpu_custom_call.1} parent=1 // loop_footer_branch
      %13 = sbr.rel target = $region3
    $region8: #{tpu_custom_call.1} parent=1 // loop_exit
      _
    %841 = vsyncpa [#allocation3], 1
    %s842 = scalar_lea.sflag [#allocation3], 1
    %843 = vsyncpa %s842, 1
    %844 = vsyncpa [#allocation4], 1
    %s845 = scalar_lea.sflag [#allocation4], 1
    %846 = vsyncpa %s845, 1

</llo_original>
